<compile_context>
chip_gen: v7x
topology: tpu7x:2x2x1
jax: 0.10.0
libtpu: 0.0.40
codegen_flags: <defaults>
</compile_context>

<pallas_src>
import functools

import jax
import jax.numpy as jnp
from jax.experimental import pallas as pl
from jax.experimental.pallas import tpu as pltpu

EPS = 1e-5          # nn.GroupNorm default eps
NUM_GROUPS = 32     # nn.GroupNorm(32, C)


# ---------------------------------------------------------------------------
# Helpers
# ---------------------------------------------------------------------------
def _group_matrix(C):
    """One-hot (C, G) matrix so group reduce / broadcast-back run on the MXU."""
    cg = C // NUM_GROUPS
    ch = jnp.arange(C)
    return (ch[:, None] // cg == jnp.arange(NUM_GROUPS)[None, :]).astype(jnp.float32)


def _pick_cout_tile(Cin, Cout):
    """Largest lane-aligned Cout tile whose double-buffered f32 weight block fits a budget."""
    budget = 8 << 20
    best = Cout
    for tn in (512, 256, 128):
        if Cout % tn == 0:
            best = tn
            if 2 * 9 * Cin * tn * 4 <= budget:
                return tn
    return best


def _pick_row_tile(H, W, Cin, tn):
    """Largest row tile (divisor of H) whose per-tile f32 working set fits a budget."""
    per_row = W * (3 * Cin + tn + Cin) * 4          # slab rows + accumulator + x rows
    cap = max(1, (6 << 20) // max(per_row, 1))
    for th in range(min(H, cap), 0, -1):
        if H % th == 0:
            return th
    return H


# ---------------------------------------------------------------------------
# Kernel 1: fused  GroupNorm + SiLU + 3x3 conv (padding=1) + epilogue add.
#   grid = (N, Cout tiles, row tiles)
#   Prologue (once per image, j==0 & r==0):
#     - GroupNorm statistics via two tiny one-hot MXU matmuls,
#     - affine + SiLU,
#     - result written into a zero-padded VMEM "halo slab" (H+2, W, 3*Cin)
#       where lane block dx*Cin..(dx+1)*Cin holds the dx-shifted image.
#   Each (th x W) row tile then does 3 MXU matmuls with K = 3*Cin (one per dy).
#   mode:
#     "time"     : add  SiLU(time) @ lin_w + lin_b          (UNET_ResidualBlock conv_feature)
#     "res_proj" : add  x_res @ res_w + res_b   (1x1 conv)  (UNET_ResidualBlock conv_merged)
#     "res_id"   : add  x_res                   (identity)  (UNET_ResidualBlock conv_merged)
#     "none"     : no add                                   (UNET_OutputLayer conv)
# TODO(synk): for very large H*W*Cin the once-per-image prologue (full image in
# VMEM) should be spatially tiled with an accumulating stats grid axis.
# ---------------------------------------------------------------------------
def _fused_gn_silu_conv_kernel(*refs, mode, H, W, th):
    if mode == "time":
        (x_ref, g_ref, bt_ref, m_ref, w3_ref, b_ref,
         t_ref, lw_ref, lb_ref, o_ref, slab_ref) = refs
    elif mode == "res_proj":
        (x_ref, g_ref, bt_ref, m_ref, w3_ref, b_ref,
         xr_ref, rw_ref, rb_ref, o_ref, slab_ref) = refs
    elif mode == "res_id":
        (x_ref, g_ref, bt_ref, m_ref, w3_ref, b_ref, xr_ref, o_ref, slab_ref) = refs
    else:
        (x_ref, g_ref, bt_ref, m_ref, w3_ref, b_ref, o_ref, slab_ref) = refs

    j = pl.program_id(1)          # Cout tile
    r = pl.program_id(2)          # row tile
    C = x_ref.shape[-1]
    tn = o_ref.shape[-1]

    # --- prologue (once per image): GN stats + affine + SiLU -> halo slab ----
    @pl.when((j == 0) & (r == 0))
    def _prologue():
        x = x_ref[0].astype(jnp.float32)                               # (H, W, C)
        m = m_ref[...]                                                 # (C, G)
        cnt = jnp.float32(H * W * (C // NUM_GROUPS))

        x2 = x.reshape(H * W, C)
        s1 = jnp.sum(x2, axis=0, keepdims=True)                        # (1, C)
        s2 = jnp.sum(x2 * x2, axis=0, keepdims=True)                   # (1, C)
        gmean = jnp.dot(s1, m, preferred_element_type=jnp.float32) / cnt   # (1, G)
        gsq = jnp.dot(s2, m, preferred_element_type=jnp.float32) / cnt
        gvar = jnp.maximum(gsq - gmean * gmean, 0.0)
        grstd = jax.lax.rsqrt(gvar + EPS)
        mean_c = jnp.dot(gmean, m.T, preferred_element_type=jnp.float32)   # (1, C)
        rstd_c = jnp.dot(grstd, m.T, preferred_element_type=jnp.float32)   # (1, C)

        gamma = g_ref[0].astype(jnp.float32)                           # (1, C)
        beta = bt_ref[0].astype(jnp.float32)                           # (1, C)
        sc = rstd_c * gamma
        sh = beta - mean_c * sc

        xn = x * sc + sh
        act = xn * jax.nn.sigmoid(xn)                                  # SiLU, (H, W, C)

        slab_ref[...] = jnp.zeros_like(slab_ref)
        slab_ref[1:H + 1, :, C:2 * C] = act                            # dx = 1 (centre)
        slab_ref[1:H + 1, 1:, 0:C] = act[:, :W - 1, :]                 # dx = 0 (left)
        slab_ref[1:H + 1, :W - 1, 2 * C:] = act[:, 1:, :]              # dx = 2 (right)

    # --- 3x3 conv over a (th x W) row tile: 3 MXU matmuls, K = 3*C ----------
    acc = jnp.zeros((th * W, tn), jnp.float32)
    for dy in range(3):
        lhs = slab_ref[pl.ds(r * th + dy, th), :, :].reshape(th * W, 3 * C)
        acc = acc + jnp.dot(lhs, w3_ref[dy].astype(jnp.float32),
                            preferred_element_type=jnp.float32)
    acc = acc + b_ref[...].astype(jnp.float32)                         # (1, tn) bias

    # --- fused epilogue add ---------------------------------------------------
    if mode == "time":
        t = t_ref[0].astype(jnp.float32)                               # (1, NT)
        t = t * jax.nn.sigmoid(t)                                      # SiLU(time)
        acc = acc + (jnp.dot(t, lw_ref[...].astype(jnp.float32),
                             preferred_element_type=jnp.float32)
                     + lb_ref[...].astype(jnp.float32))
    elif mode == "res_proj":
        xr = xr_ref[0].astype(jnp.float32).reshape(th * W, xr_ref.shape[-1])
        acc = acc + (jnp.dot(xr, rw_ref[...].astype(jnp.float32),
                             preferred_element_type=jnp.float32)
                     + rb_ref[...].astype(jnp.float32))
    elif mode == "res_id":
        acc = acc + xr_ref[0].astype(jnp.float32).reshape(th * W, tn)

    o_ref[0] = acc.reshape(th, W, tn).astype(o_ref.dtype)


def gn_silu_conv3x3(x, gamma, beta, w3, b, *, mode="none",
                    time=None, lin_w=None, lin_b=None,
                    x_res=None, res_w=None, res_b=None):
    # x: (N,H,W,Cin)  gamma/beta: (1,1,Cin)  w3: (3, 3*Cin, Cout)  b: (1, Cout)
    N, H, W, Cin = x.shape
    Cout = w3.shape[-1]
    tn = _pick_cout_tile(Cin, Cout)
    th = _pick_row_tile(H, W, Cin, tn)
    n_r, n_j = H // th, Cout // tn
    m = _group_matrix(Cin)

    in_specs = [
        pl.BlockSpec((1, H, W, Cin), lambda n, j, r: (n, 0, 0, 0)),
        pl.BlockSpec((1, 1, Cin), lambda n, j, r: (0, 0, 0)),
        pl.BlockSpec((1, 1, Cin), lambda n, j, r: (0, 0, 0)),
        pl.BlockSpec((Cin, NUM_GROUPS), lambda n, j, r: (0, 0)),
        pl.BlockSpec((3, 3 * Cin, tn), lambda n, j, r: (0, 0, j)),
        pl.BlockSpec((1, tn), lambda n, j, r: (0, j)),
    ]
    args = [x, gamma, beta, m, w3, b]

    if mode == "time":
        NT = time.shape[-1]
        in_specs += [
            pl.BlockSpec((1, 1, NT), lambda n, j, r: (n, 0, 0)),
            pl.BlockSpec((NT, tn), lambda n, j, r: (0, j)),
            pl.BlockSpec((1, tn), lambda n, j, r: (0, j)),
        ]
        args += [time, lin_w, lin_b]
    elif mode == "res_proj":
        CR = x_res.shape[-1]
        in_specs += [
            pl.BlockSpec((1, th, W, CR), lambda n, j, r: (n, r, 0, 0)),
            pl.BlockSpec((CR, tn), lambda n, j, r: (0, j)),
            pl.BlockSpec((1, tn), lambda n, j, r: (0, j)),
        ]
        args += [x_res, res_w, res_b]
    elif mode == "res_id":
        in_specs += [pl.BlockSpec((1, th, W, tn), lambda n, j, r: (n, r, 0, j))]
        args += [x_res]

    kern = functools.partial(_fused_gn_silu_conv_kernel, mode=mode, H=H, W=W, th=th)
    return pl.pallas_call(
        kern,
        out_shape=jax.ShapeDtypeStruct((N, H, W, Cout), x.dtype),
        grid=(N, n_j, n_r),
        in_specs=in_specs,
        out_specs=pl.BlockSpec((1, th, W, tn), lambda n, j, r: (n, r, 0, j)),
        scratch_shapes=[pltpu.VMEM((H + 2, W, 3 * Cin), jnp.float32)],
        compiler_params=pltpu.CompilerParams(
            dimension_semantics=("parallel", "arbitrary", "arbitrary")),
    )(*args)


# ---------------------------------------------------------------------------
# Kernel 2: TimeEmbedding  (linear -> SiLU -> linear), single fused launch.
# ---------------------------------------------------------------------------
def _time_embed_kernel(t_ref, w1_ref, b1_ref, w2_ref, b2_ref, o_ref):
    t = t_ref[...].astype(jnp.float32)
    h = jnp.dot(t, w1_ref[...].astype(jnp.float32),
                preferred_element_type=jnp.float32) + b1_ref[...]
    h = h * jax.nn.sigmoid(h)
    o = jnp.dot(h, w2_ref[...].astype(jnp.float32),
                preferred_element_type=jnp.float32) + b2_ref[...]
    o_ref[...] = o.astype(o_ref.dtype)


def time_embedding(t, w1, b1, w2, b2):
    B, D = t.shape
    Dh = w1.shape[-1]
    return pl.pallas_call(
        _time_embed_kernel,
        out_shape=jax.ShapeDtypeStruct((B, Dh), t.dtype),
        grid=(1,),
        in_specs=[
            pl.BlockSpec((B, D), lambda i: (0, 0)),
            pl.BlockSpec((D, Dh), lambda i: (0, 0)),
            pl.BlockSpec((1, Dh), lambda i: (0, 0)),
            pl.BlockSpec((Dh, Dh), lambda i: (0, 0)),
            pl.BlockSpec((1, Dh), lambda i: (0, 0)),
        ],
        out_specs=pl.BlockSpec((B, Dh), lambda i: (0, 0)),
    )(t, w1, b1, w2, b2)


# ---------------------------------------------------------------------------
# Module-level wrappers (NCHW in / NCHW out; all hot compute in the kernels).
# ---------------------------------------------------------------------------
def unet_residual_block(feature_nchw, time_vec, params):
    x = jnp.transpose(feature_nchw, (0, 2, 3, 1))              # -> NHWC
    N, H, W, Cin = x.shape
    Cout = params["conv1_w"].shape[-1]
    w1_3 = params["conv1_w"].reshape(3, 3 * Cin, Cout)         # (dy, dx*Cin+c, Cout)
    w2_3 = params["conv2_w"].reshape(3, 3 * Cout, Cout)

    t = time_vec
    if t.shape[0] != N:
        t = jnp.broadcast_to(t, (N, t.shape[-1]))
    t = t.reshape(N, 1, -1)

    merged = gn_silu_conv3x3(x, params["gn1_gamma"], params["gn1_beta"],
                             w1_3, params["conv1_b"],
                             mode="time", time=t,
                             lin_w=params["lin_w"], lin_b=params["lin_b"])

    if params.get("res_w") is None:                            # nn.Identity
        out = gn_silu_conv3x3(merged, params["gn2_gamma"], params["gn2_beta"],
                              w2_3, params["conv2_b"],
                              mode="res_id", x_res=x)
    else:                                                      # 1x1 conv projection
        out = gn_silu_conv3x3(merged, params["gn2_gamma"], params["gn2_beta"],
                              w2_3, params["conv2_b"],
                              mode="res_proj", x_res=x,
                              res_w=params["res_w"], res_b=params["res_b"])
    return jnp.transpose(out, (0, 3, 1, 2))                    # -> NCHW


def unet_output_layer(x_nchw, params):
    x = jnp.transpose(x_nchw, (0, 2, 3, 1))
    N, H, W, Cin = x.shape
    Cout = params["conv_w"].shape[-1]
    w3 = params["conv_w"].reshape(3, 3 * Cin, Cout)
    out = gn_silu_conv3x3(x, params["gn_gamma"], params["gn_beta"],
                          w3, params["conv_b"], mode="none")
    return jnp.transpose(out, (0, 3, 1, 2))


def diffusion_blocks(latent, t_raw, te, rb1, rb2, ol):
    """Mini Diffusion tail: TimeEmbedding -> ResBlock(proj) -> ResBlock(id) -> OutputLayer."""
    t_emb = time_embedding(t_raw, te["w1"], te["b1"], te["w2"], te["b2"])
    h = unet_residual_block(latent, t_emb, rb1)
    h = unet_residual_block(h, t_emb, rb2)
    return unet_output_layer(h, ol)


# ---------------------------------------------------------------------------
# Pure-JAX reference (correctness check only).
# ---------------------------------------------------------------------------
def _ref_gn_silu(v, g, b):
    N, H, W, C = v.shape
    vg = v.reshape(N, H * W, NUM_GROUPS, C // NUM_GROUPS)
    mean = vg.mean(axis=(1, 3), keepdims=True)
    var = ((vg - mean) ** 2).mean(axis=(1, 3), keepdims=True)
    vn = ((vg - mean) / jnp.sqrt(var + EPS)).reshape(N, H, W, C)
    vn = vn * g.reshape(1, 1, 1, C) + b.reshape(1, 1, 1, C)
    return vn * jax.nn.sigmoid(vn)


def _ref_conv3(v, w9, b):
    hp = jax.lax.Precision.HIGHEST
    N, H, W, Cin = v.shape
    Cout = w9.shape[-1]
    vp = jnp.pad(v, ((0, 0), (1, 1), (1, 1), (0, 0)))
    out = jnp.zeros((N, H, W, Cout), jnp.float32)
    for t in range(9):
        dy, dx = t // 3, t % 3
        out = out + jnp.einsum('nhwc,cd->nhwd', vp[:, dy:dy + H, dx:dx + W, :],
                               w9[t], precision=hp)
    return out + b.reshape(1, 1, 1, Cout)


def _ref_residual_block(x_nchw, t, p):
    hp = jax.lax.Precision.HIGHEST
    x = jnp.transpose(x_nchw, (0, 2, 3, 1)).astype(jnp.float32)
    N = x.shape[0]
    tt = jnp.broadcast_to(t, (N, t.shape[-1])).astype(jnp.float32)
    h = _ref_gn_silu(x, p["gn1_gamma"], p["gn1_beta"])
    temb = jnp.dot(tt * jax.nn.sigmoid(tt), p["lin_w"], precision=hp) + p["lin_b"].reshape(-1)
    merged = _ref_conv3(h, p["conv1_w"], p["conv1_b"].reshape(-1)) + temb[:, None, None, :]
    m = _ref_gn_silu(merged, p["gn2_gamma"], p["gn2_beta"])
    if p.get("res_w") is None:
        res = x
    else:
        res = jnp.einsum('nhwc,cd->nhwd', x, p["res_w"], precision=hp) + p["res_b"].reshape(-1)
    out = _ref_conv3(m, p["conv2_w"], p["conv2_b"].reshape(-1)) + res
    return jnp.transpose(out, (0, 3, 1, 2))


def _ref_output_layer(x_nchw, p):
    x = jnp.transpose(x_nchw, (0, 2, 3, 1)).astype(jnp.float32)
    h = _ref_gn_silu(x, p["gn_gamma"], p["gn_beta"])
    out = _ref_conv3(h, p["conv_w"], p["conv_b"].reshape(-1))
    return jnp.transpose(out, (0, 3, 1, 2))


def _ref_time_embedding(t, p):
    hp = jax.lax.Precision.HIGHEST
    h = jnp.dot(t, p["w1"], precision=hp) + p["b1"].reshape(-1)
    h = h * jax.nn.sigmoid(h)
    return jnp.dot(h, p["w2"], precision=hp) + p["b2"].reshape(-1)


def _ref_pipeline(latent, t_raw, te, rb1, rb2, ol):
    t_emb = _ref_time_embedding(t_raw, te)
    h = _ref_residual_block(latent, t_emb, rb1)
    h = _ref_residual_block(h, t_emb, rb2)
    return _ref_output_layer(h, ol)


if __name__ == "__main__":
    # GroupNorm(32, C) needs C % 32 == 0.  Small but representative shapes:
    # 128 -> 256 (1x1 residual projection) -> 256 (identity residual) -> 4.
    N, CIN, CMID, COUT, H, W, NEMB = 2, 128, 256, 4, 16, 16, 64
    NTIME = 4 * NEMB   # TimeEmbedding(NEMB) output width, consumed by linear_time

    key = jax.random.PRNGKey(0)
    ks = iter(jax.random.split(key, 64))
    f32 = jnp.float32

    def rnd(shape, scale=1.0):
        return scale * jax.random.normal(next(ks), shape, f32)

    latent = rnd((N, CIN, H, W))
    t_raw = rnd((1, NEMB))

    te = {
        "w1": rnd((NEMB, 4 * NEMB), NEMB ** -0.5),
        "b1": rnd((1, 4 * NEMB), 0.05),
        "w2": rnd((4 * NEMB, 4 * NEMB), (4 * NEMB) ** -0.5),
        "b2": rnd((1, 4 * NEMB), 0.05),
    }

    def resblock_params(cin, cout, identity):
        p = {
            "gn1_gamma": 1.0 + rnd((1, 1, cin), 0.1),
            "gn1_beta": rnd((1, 1, cin), 0.1),
            # PyTorch conv weight (Cout, Cin, 3, 3) stored tap-major as (9, Cin, Cout)
            "conv1_w": rnd((9, cin, cout), (9 * cin) ** -0.5),
            "conv1_b": rnd((1, cout), 0.05),
            "lin_w": rnd((NTIME, cout), NTIME ** -0.5),
            "lin_b": rnd((1, cout), 0.05),
            "gn2_gamma": 1.0 + rnd((1, 1, cout), 0.1),
            "gn2_beta": rnd((1, 1, cout), 0.1),
            "conv2_w": rnd((9, cout, cout), (9 * cout) ** -0.5),
            "conv2_b": rnd((1, cout), 0.05),
            "res_w": None,
            "res_b": None,
        }
        if not identity:
            p["res_w"] = rnd((cin, cout), cin ** -0.5)
            p["res_b"] = rnd((1, cout), 0.05)
        return p

    rb1 = resblock_params(CIN, CMID, identity=False)
    rb2 = resblock_params(CMID, CMID, identity=True)

    ol = {
        "gn_gamma": 1.0 + rnd((1, 1, CMID), 0.1),
        "gn_beta": rnd((1, 1, CMID), 0.1),
        "conv_w": rnd((9, CMID, COUT), (9 * CMID) ** -0.5),
        "conv_b": rnd((1, COUT), 0.05),
    }

    out = diffusion_blocks(latent, t_raw, te, rb1, rb2, ol)
    out = jax.block_until_ready(out)
    assert out.shape == (N, COUT, H, W)

    ref = jax.block_until_ready(_ref_pipeline(latent, t_raw, te, rb1, rb2, ol))
    err = float(jnp.max(jnp.abs(out - ref)))
    assert jnp.allclose(out, ref, rtol=2e-2, atol=2e-2), f"mismatch vs reference, max |err|={err}"

    print("KERNEL_OK")
</pallas_src>

<mosaic_0001>
module attributes {stable_mosaic.version = 11 : i64} {
  func.func @_time_embed_kernel(%arg0: i32, %arg1: memref<1x64xf32, #tpu.memory_space<vmem>>, %arg2: memref<64x256xf32, #tpu.memory_space<vmem>>, %arg3: memref<1x256xf32, #tpu.memory_space<vmem>>, %arg4: memref<256x256xf32, #tpu.memory_space<vmem>>, %arg5: memref<1x256xf32, #tpu.memory_space<vmem>>, %arg6: memref<1x256xf32, #tpu.memory_space<vmem>>) attributes {dimension_semantics = [#tpu.dimension_semantics<arbitrary>], iteration_bounds = array<i64: 1>, scalar_prefetch = 0 : i64, scratch_operands = 0 : i64, tpu.core_type = #tpu.core_type<tc>, window_params = [{pipeline_mode = #tpu.pipeline_mode<synchronous>, transform_indices = @transform_0, window_bounds = array<i64: 1, 64>}, {pipeline_mode = #tpu.pipeline_mode<synchronous>, transform_indices = @transform_1, window_bounds = array<i64: 64, 256>}, {pipeline_mode = #tpu.pipeline_mode<synchronous>, transform_indices = @transform_2, window_bounds = array<i64: 1, 256>}, {pipeline_mode = #tpu.pipeline_mode<synchronous>, transform_indices = @transform_3, window_bounds = array<i64: 256, 256>}, {pipeline_mode = #tpu.pipeline_mode<synchronous>, transform_indices = @transform_4, window_bounds = array<i64: 1, 256>}, {pipeline_mode = #tpu.pipeline_mode<synchronous>, transform_indices = @transform_5, window_bounds = array<i64: 1, 256>}]} {
    %c0 = arith.constant 0 : index
    %c0_0 = arith.constant 0 : index
    %0 = vector.load %arg1[%c0, %c0_0] : memref<1x64xf32, #tpu.memory_space<vmem>>, vector<1x64xf32>
    %c0_1 = arith.constant 0 : index
    %c0_2 = arith.constant 0 : index
    %1 = vector.load %arg2[%c0_1, %c0_2] : memref<64x256xf32, #tpu.memory_space<vmem>>, vector<64x256xf32>
    %cst = arith.constant dense<0.000000e+00> : vector<1x256xf32>
    %2 = tpu.matmul %0, %1, %cst {dimension_numbers = #tpu.dot_dimension_numbers<[1], [0], [0], [1], [0, 0, 1, 1], [], []>} : vector<1x64xf32>, vector<64x256xf32>, vector<1x256xf32> -> vector<1x256xf32>
    %c0_3 = arith.constant 0 : index
    %c0_4 = arith.constant 0 : index
    %3 = vector.load %arg3[%c0_3, %c0_4] : memref<1x256xf32, #tpu.memory_space<vmem>>, vector<1x256xf32>
    %4 = arith.addf %2, %3 : vector<1x256xf32>
    %5 = arith.negf %4 : vector<1x256xf32>
    %6 = math.exp %5 : vector<1x256xf32>
    %cst_5 = arith.constant 1.000000e+00 : f32
    %7 = vector.broadcast %cst_5 : f32 to vector<1x256xf32>
    %8 = arith.addf %7, %6 : vector<1x256xf32>
    %9 = arith.divf %7, %8 : vector<1x256xf32>
    %10 = arith.mulf %4, %9 : vector<1x256xf32>
    %c0_6 = arith.constant 0 : index
    %c0_7 = arith.constant 0 : index
    %11 = vector.load %arg4[%c0_6, %c0_7] : memref<256x256xf32, #tpu.memory_space<vmem>>, vector<256x256xf32>
    %cst_8 = arith.constant dense<0.000000e+00> : vector<1x256xf32>
    %12 = tpu.matmul %10, %11, %cst_8 {dimension_numbers = #tpu.dot_dimension_numbers<[1], [0], [0], [1], [0, 0, 1, 1], [], []>} : vector<1x256xf32>, vector<256x256xf32>, vector<1x256xf32> -> vector<1x256xf32>
    %c0_9 = arith.constant 0 : index
    %c0_10 = arith.constant 0 : index
    %13 = vector.load %arg5[%c0_9, %c0_10] : memref<1x256xf32, #tpu.memory_space<vmem>>, vector<1x256xf32>
    %14 = arith.addf %12, %13 : vector<1x256xf32>
    %c0_11 = arith.constant 0 : index
    %c0_12 = arith.constant 0 : index
    %15 = vector.load %arg6[%c0_11, %c0_12] : memref<1x256xf32, #tpu.memory_space<vmem>>, vector<1x256xf32>
    tpu.vector_store %arg6[%c0_11, %c0_12], %14 {strides = array<i32>} : memref<1x256xf32, #tpu.memory_space<vmem>>, vector<1x256xf32>,
    return
  }
  func.func @transform_0(%arg0: i32) -> (i32, i32) {
    %c0_i32 = arith.constant 0 : i32
    %c0_i32_0 = arith.constant 0 : i32
    %c0_i32_1 = arith.constant 0 : i32
    return %c0_i32, %c0_i32_0 : i32, i32
  }
  func.func @transform_1(%arg0: i32) -> (i32, i32) {
    %c0_i32 = arith.constant 0 : i32
    %c0_i32_0 = arith.constant 0 : i32
    %c0_i32_1 = arith.constant 0 : i32
    return %c0_i32, %c0_i32_0 : i32, i32
  }
  func.func @transform_2(%arg0: i32) -> (i32, i32) {
    %c0_i32 = arith.constant 0 : i32
    %c0_i32_0 = arith.constant 0 : i32
    %c0_i32_1 = arith.constant 0 : i32
    return %c0_i32, %c0_i32_0 : i32, i32
  }
  func.func @transform_3(%arg0: i32) -> (i32, i32) {
    %c0_i32 = arith.constant 0 : i32
    %c0_i32_0 = arith.constant 0 : i32
    %c0_i32_1 = arith.constant 0 : i32
    return %c0_i32, %c0_i32_0 : i32, i32
  }
  func.func @transform_4(%arg0: i32) -> (i32, i32) {
    %c0_i32 = arith.constant 0 : i32
    %c0_i32_0 = arith.constant 0 : i32
    %c0_i32_1 = arith.constant 0 : i32
    return %c0_i32, %c0_i32_0 : i32, i32
  }
  func.func @transform_5(%arg0: i32) -> (i32, i32) {
    %c0_i32 = arith.constant 0 : i32
    %c0_i32_0 = arith.constant 0 : i32
    %c0_i32_1 = arith.constant 0 : i32
    return %c0_i32, %c0_i32_0 : i32, i32
  }
}

</mosaic_0001>

<llo_original>
// kernel: tpu_custom_call.1
$region0: #{tpu_custom_call.1}
  #allocation0 [shape = 'u32[]', space=smem, size = 0x4, offset = 0x4, fixed_abs, tag = 'smem constant byte address 0x4 - core index']
  #allocation1 [shape = 'u32[144,128]{1,0:T(1,128)}', space=vmem, size = 0x12000, scoped, tag = 'internal scratch']
  %s0 = inlined_call_operand.hbm [shape: f32[1,64], index: 0, kind: input, shape index: {}]
  %s1 = inlined_call_operand.hbm [shape: f32[64,256], index: 1, kind: input, shape index: {}]
  %s2 = inlined_call_operand.vmem [shape: f32[1,256], index: 2, kind: input, shape index: {}]
  %s3 = inlined_call_operand.hbm [shape: f32[256,256], index: 3, kind: input, shape index: {}]
  %s4 = inlined_call_operand.vmem [shape: f32[1,256], index: 4, kind: input, shape index: {}]
  %s5 = inlined_call_operand.hbm [shape: f32[1,256], index: 5, kind: output, shape index: {}]
  %s6 = sld [smem:[#allocation0]]
  $region42: #{tpu_custom_call.1} parent=0
    _
  %s8 = ssub.s32 1, %s6
  %s9 = scalar_select 0, %s8, %s6
  $region1: #{tpu_custom_call.1} parent=0
    #allocation2 [shape = 'u8[512]{0}', space=vmem, size = 0x400, scoped, tag = 'input window, operand 0, single buffered']
    #allocation3 [shape = 's32[1]{0}', space=sflag, size = 0x4, scoped, tag = 'scoped memory for tpu_custom_call.1']
    #allocation4 [shape = 's32[1]{0}', space=sflag, size = 0x4, scoped, tag = 'scoped memory for tpu_custom_call.1']
    #allocation5 [shape = 'u8[65536]{0}', space=vmem, size = 0x10000, scoped, tag = 'input window, operand 1, single buffered']
    #allocation6 [shape = 's32[1]{0}', space=sflag, size = 0x4, scoped, tag = 'scoped memory for tpu_custom_call.1']
    #allocation7 [shape = 'u8[262144]{0}', space=vmem, size = 0x40000, scoped, tag = 'input window, operand 3, single buffered']
    #allocation8 [shape = 'u8[1024]{0}', space=vmem, size = 0x400, scoped, tag = 'output window, operand 0, single buffered']
    %10 = vsyncpa [#allocation3], 0
    %11 = vsyncpa [#allocation6], 0
    %12 = vsyncpa [#allocation4], 0
    // Predicated region
    $region2: #{tpu_custom_call.1} parent=1 // pred_check
      _
    $region3: #{tpu_custom_call.1} parent=1 // pred_check_branch
      %14 = sbr.rel (0) target = $region5
    $region4: #{tpu_custom_call.1} parent=1 // pred_region
      %s16 = ssub.s32 16, 16
      %17 = vsyncadd [#allocation3], %s16
      %s19 = sshll.u32 [#allocation2], 4
      %s20 = int_to_ptr.vmem [resolvable:$true] %s19
      %22 = dma.hbm_to_vmem [thread:$0]  %s0, 16, %s20, [#allocation3]
    $region5: #{tpu_custom_call.1} parent=1 // pred_fallthru
      _
    // Predicated region
    $region6: #{tpu_custom_call.1} parent=1 // pred_check
      _
    $region7: #{tpu_custom_call.1} parent=1 // pred_check_branch
      %24 = sbr.rel (0) target = $region9
    $region8: #{tpu_custom_call.1} parent=1 // pred_region
      %s26 = ssub.s32 2048, 2048
      %27 = vsyncadd [#allocation6], %s26
      %s28 = sshll.u32 [#allocation5], 4
      %s29 = int_to_ptr.vmem [resolvable:$true] %s28
      %34 = dma.hbm_to_vmem [thread:$0]  %s1, 2048, %s29, [#allocation6], 256, 256, 16
    $region9: #{tpu_custom_call.1} parent=1 // pred_fallthru
      _
    // Predicated region
    $region10: #{tpu_custom_call.1} parent=1 // pred_check
      _
    $region11: #{tpu_custom_call.1} parent=1 // pred_check_branch
      %36 = sbr.rel (0) target = $region13
    $region12: #{tpu_custom_call.1} parent=1 // pred_region
      _
    $region13: #{tpu_custom_call.1} parent=1 // pred_fallthru
      _
    // Predicated region
    $region14: #{tpu_custom_call.1} parent=1 // pred_check
      _
    $region15: #{tpu_custom_call.1} parent=1 // pred_check_branch
      %38 = sbr.rel (0) target = $region17
    $region16: #{tpu_custom_call.1} parent=1 // pred_region
      %s40 = ssub.s32 8192, 8192
      %41 = vsyncadd [#allocation6], %s40
      %s42 = sshll.u32 [#allocation7], 4
      %s43 = int_to_ptr.vmem [resolvable:$true] %s42
      %48 = dma.hbm_to_vmem [thread:$0]  %s3, 8192, %s43, [#allocation6], 256, 256, 16
    $region17: #{tpu_custom_call.1} parent=1 // pred_fallthru
      _
    // Predicated region
    $region18: #{tpu_custom_call.1} parent=1 // pred_check
      _
    $region19: #{tpu_custom_call.1} parent=1 // pred_check_branch
      %50 = sbr.rel (0) target = $region21
    $region20: #{tpu_custom_call.1} parent=1 // pred_region
      _
    $region21: #{tpu_custom_call.1} parent=1 // pred_fallthru
      _
    // Predicated region
    $region22: #{tpu_custom_call.1} parent=1 // pred_check
      _
    $region23: #{tpu_custom_call.1} parent=1 // pred_check_branch
      %52 = sbr.rel (0) target = $region25
    $region24: #{tpu_custom_call.1} parent=1 // pred_region
      %53 = dma.done [#allocation3], 16
    $region25: #{tpu_custom_call.1} parent=1 // pred_fallthru
      _
    // Predicated region
    $region26: #{tpu_custom_call.1} parent=1 // pred_check
      _
    $region27: #{tpu_custom_call.1} parent=1 // pred_check_branch
      %55 = sbr.rel (0) target = $region29
    $region28: #{tpu_custom_call.1} parent=1 // pred_region
      %56 = dma.done [#allocation6], 2048
    $region29: #{tpu_custom_call.1} parent=1 // pred_fallthru
      _
    // Predicated region
    $region30: #{tpu_custom_call.1} parent=1 // pred_check
      _
    $region31: #{tpu_custom_call.1} parent=1 // pred_check_branch
      %58 = sbr.rel (0) target = $region33
    $region32: #{tpu_custom_call.1} parent=1 // pred_region
      %59 = dma.done [#allocation6], 8192
    $region33: #{tpu_custom_call.1} parent=1 // pred_fallthru
      _
    %v60 = vld [vmem:[#allocation2] sm:$0x1]
    %v61 = vld [vmem:[#allocation5] sm:$0xff]
    %v62 = vld [vmem:[#allocation5 + $0x8] sm:$0xff]
    %v63 = vld [vmem:[#allocation5 + $0x10] sm:$0xff]
    %v64 = vld [vmem:[#allocation5 + $0x18] sm:$0xff]
    %v65 = vld [vmem:[#allocation5 + $0x20] sm:$0xff]
    %v66 = vld [vmem:[#allocation5 + $0x28] sm:$0xff]
    %v67 = vld [vmem:[#allocation5 + $0x30] sm:$0xff]
    %v68 = vld [vmem:[#allocation5 + $0x38] sm:$0xff]
    %v69 = vld [vmem:[#allocation5 + $0x40] sm:$0xff]
    %v70 = vld [vmem:[#allocation5 + $0x48] sm:$0xff]
    %v71 = vld [vmem:[#allocation5 + $0x50] sm:$0xff]
    %v72 = vld [vmem:[#allocation5 + $0x58] sm:$0xff]
    %v73 = vld [vmem:[#allocation5 + $0x60] sm:$0xff]
    %v74 = vld [vmem:[#allocation5 + $0x68] sm:$0xff]
    %v75 = vld [vmem:[#allocation5 + $0x70] sm:$0xff]
    %v76 = vld [vmem:[#allocation5 + $0x78] sm:$0xff]
    %v77 = vld [vmem:[%s2] sm:$0x3]
    %v79 = vlaneseq
    %v80 = vshrl.u32 %v79, 7
    %v81 = vsub.s32 0, %v80
    %v82 = vrot.slane %v77, %v81
    %v83 = vlaneseq
    %v84 = vshrl.u32 %v83, 7
    %v85 = vsub.s32 1, %v84
    %v86 = vrot.slane %v77, %v85
    %vm89 = vcmask 523264
    %v91 = vsel %vm89, %v60, 0
    %93 = vmatprep.subr.mxu0 %v62
    %94 = vmatpush1.msra.mxu0 %v61
    %95 = vmatprep.subr.mxu0 %v64
    %96 = vmatpush1.msra.mxu0 %v63
    %97 = vmatprep.subr.mxu0 %v66
    %98 = vmatpush1.msra.mxu0 %v65
    %99 = vmatprep.subr.mxu0 %v68
    %100 = vmatpush1.msra.mxu0 %v67
    %101 = vmatprep.subr.mxu0 %v70
    %102 = vmatpush1.msra.mxu0 %v69
    %103 = vmatprep.subr.mxu0 %v72
    %104 = vmatpush1.msra.mxu0 %v71
    %105 = vmatprep.subr.mxu0 %v74
    %106 = vmatpush1.msra.mxu0 %v73
    %107 = vmatprep.subr.mxu0 %v76
    %108 = vmatpush1.msra.mxu0 %v75
    %109 = vmatprep.subr.mxu0 0.0
    %110 = vmatpush1.msra.mxu0 0.0
    %111 = vmatprep.subr.mxu0 0.0
    %112 = vmatpush1.msra.mxu0 0.0
    %113 = vmatprep.subr.mxu0 0.0
    %114 = vmatpush1.msra.mxu0 0.0
    %115 = vmatprep.subr.mxu0 0.0
    %116 = vmatpush1.msra.mxu0 0.0
    %117 = vmatprep.subr.mxu0 0.0
    %118 = vmatpush1.msra.mxu0 0.0
    %119 = vmatprep.subr.mxu0 0.0
    %120 = vmatpush1.msra.mxu0 0.0
    %121 = vmatprep.subr.mxu0 0.0
    %122 = vmatpush1.msra.mxu0 0.0
    %123 = vmatprep.subr.mxu0 0.0
    %124 = vmatpush1.msra.mxu0 0.0
    %125 = vmatprep.subr.mxu0 0.0
    %126 = vmatpush1.msra.mxu0 0.0
    %127 = vmatprep.subr.mxu0 0.0
    %128 = vmatpush1.msra.mxu0 0.0
    %129 = vmatprep.subr.mxu0 0.0
    %130 = vmatpush1.msra.mxu0 0.0
    %131 = vmatprep.subr.mxu0 0.0
    %132 = vmatpush1.msra.mxu0 0.0
    %133 = vmatprep.subr.mxu0 0.0
    %134 = vmatpush1.msra.mxu0 0.0
    %135 = vmatprep.subr.mxu0 0.0
    %136 = vmatpush1.msra.mxu0 0.0
    %137 = vmatprep.subr.mxu0 0.0
    %138 = vmatpush1.msra.mxu0 0.0
    %139 = vmatprep.subr.mxu0 0.0
    %140 = vmatpush1.msra.mxu0 0.0
    %141 = vmatprep.subr.mxu0 0.0
    %142 = vmatpush1.msra.mxu0 0.0
    %143 = vmatprep.subr.mxu0 0.0
    %144 = vmatpush1.msra.mxu0 0.0
    %145 = vmatprep.subr.mxu0 0.0
    %146 = vmatpush1.msra.mxu0 0.0
    %147 = vmatprep.subr.mxu0 0.0
    %148 = vmatpush1.msra.mxu0 0.0
    %149 = vmatprep.subr.mxu0 0.0
    %150 = vmatpush1.msra.mxu0 0.0
    %151 = vmatprep.subr.mxu0 0.0
    %152 = vmatpush1.msra.mxu0 0.0
    %153 = vmatprep.subr.mxu0 0.0
    %154 = vmatpush1.msra.mxu0 0.0
    %155 = vmatprep.subr.mxu0 0.0
    %156 = vmatpush1.msra.mxu0 0.0
    %157 = vmatprep.mubr.f32.mxu0 0.0
    %158 = vmatmul.mubr.f32.gmra.mrb[0].mxu0 %v91
    %v159 = vpop.f32.mrb[0].mxu0
    %v160 = vadd.f32 %v82, %v159
    %v161 = vpop.f32.mrb[0].mxu0
    %v162 = vadd.f32 %v86, %v161
    %163 = vdwg.mxu0
    %v164 = vxor.u32 %v160, 2147483648
    %v165 = vxor.u32 %v162, 2147483648
    %v166 = vmul.f32 %v164, 1.442695
    %v167 = vpow.pop %v166
    %v168 = vmul.f32 %v165, 1.442695
    %v169 = vpow.pop %v168
    %v170 = vadd.f32 %v167, 1.0
    %v171 = vadd.f32 %v169, 1.0
    %v172 = vrcp.pop %v170
    %v173 = vmul.f32 1.0, %v172
    %v174 = vrcp.pop %v171
    %v175 = vmul.f32 1.0, %v174
    %v176 = vmul.f32 %v160, %v173
    %v177 = vmul.f32 %v162, %v175
    %v178 = vld [vmem:[#allocation7] sm:$0xff]
    %v179 = vld [vmem:[#allocation7 + $0x8] sm:$0xff]
    %v180 = vld [vmem:[#allocation7 + $0x10] sm:$0xff]
    %v181 = vld [vmem:[#allocation7 + $0x18] sm:$0xff]
    %v182 = vld [vmem:[#allocation7 + $0x20] sm:$0xff]
    %v183 = vld [vmem:[#allocation7 + $0x28] sm:$0xff]
    %v184 = vld [vmem:[#allocation7 + $0x30] sm:$0xff]
    %v185 = vld [vmem:[#allocation7 + $0x38] sm:$0xff]
    %v186 = vld [vmem:[#allocation7 + $0x40] sm:$0xff]
    %v187 = vld [vmem:[#allocation7 + $0x48] sm:$0xff]
    %v188 = vld [vmem:[#allocation7 + $0x50] sm:$0xff]
    %v189 = vld [vmem:[#allocation7 + $0x58] sm:$0xff]
    %v190 = vld [vmem:[#allocation7 + $0x60] sm:$0xff]
    %v191 = vld [vmem:[#allocation7 + $0x68] sm:$0xff]
    %v192 = vld [vmem:[#allocation7 + $0x70] sm:$0xff]
    %v193 = vld [vmem:[#allocation7 + $0x78] sm:$0xff]
    %v194 = vld [vmem:[#allocation7 + $0x80] sm:$0xff]
    %v195 = vld [vmem:[#allocation7 + $0x88] sm:$0xff]
    %v196 = vld [vmem:[#allocation7 + $0x90] sm:$0xff]
    %v197 = vld [vmem:[#allocation7 + $0x98] sm:$0xff]
    %v198 = vld [vmem:[#allocation7 + $0xa0] sm:$0xff]
    %v199 = vld [vmem:[#allocation7 + $0xa8] sm:$0xff]
    %v200 = vld [vmem:[#allocation7 + $0xb0] sm:$0xff]
    %v201 = vld [vmem:[#allocation7 + $0xb8] sm:$0xff]
    %v202 = vld [vmem:[#allocation7 + $0xc0] sm:$0xff]
    %v203 = vld [vmem:[#allocation7 + $0xc8] sm:$0xff]
    %v204 = vld [vmem:[#allocation7 + $0xd0] sm:$0xff]
    %v205 = vld [vmem:[#allocation7 + $0xd8] sm:$0xff]
    %v206 = vld [vmem:[#allocation7 + $0xe0] sm:$0xff]
    %v207 = vld [vmem:[#allocation7 + $0xe8] sm:$0xff]
    %v208 = vld [vmem:[#allocation7 + $0xf0] sm:$0xff]
    %v209 = vld [vmem:[#allocation7 + $0xf8] sm:$0xff]
    %v210 = vld [vmem:[#allocation7 + $0x100] sm:$0xff]
    %v211 = vld [vmem:[#allocation7 + $0x108] sm:$0xff]
    %v212 = vld [vmem:[#allocation7 + $0x110] sm:$0xff]
    %v213 = vld [vmem:[#allocation7 + $0x118] sm:$0xff]
    %v214 = vld [vmem:[#allocation7 + $0x120] sm:$0xff]
    %v215 = vld [vmem:[#allocation7 + $0x128] sm:$0xff]
    %v216 = vld [vmem:[#allocation7 + $0x130] sm:$0xff]
    %v217 = vld [vmem:[#allocation7 + $0x138] sm:$0xff]
    %v218 = vld [vmem:[#allocation7 + $0x140] sm:$0xff]
    %v219 = vld [vmem:[#allocation7 + $0x148] sm:$0xff]
    %v220 = vld [vmem:[#allocation7 + $0x150] sm:$0xff]
    %v221 = vld [vmem:[#allocation7 + $0x158] sm:$0xff]
    %v222 = vld [vmem:[#allocation7 + $0x160] sm:$0xff]
    %v223 = vld [vmem:[#allocation7 + $0x168] sm:$0xff]
    %v224 = vld [vmem:[#allocation7 + $0x170] sm:$0xff]
    %v225 = vld [vmem:[#allocation7 + $0x178] sm:$0xff]
    %v226 = vld [vmem:[#allocation7 + $0x180] sm:$0xff]
    %v227 = vld [vmem:[#allocation7 + $0x188] sm:$0xff]
    %v228 = vld [vmem:[#allocation7 + $0x190] sm:$0xff]
    %v229 = vld [vmem:[#allocation7 + $0x198] sm:$0xff]
    %v230 = vld [vmem:[#allocation7 + $0x1a0] sm:$0xff]
    %v231 = vld [vmem:[#allocation7 + $0x1a8] sm:$0xff]
    %v232 = vld [vmem:[#allocation7 + $0x1b0] sm:$0xff]
    %v233 = vld [vmem:[#allocation7 + $0x1b8] sm:$0xff]
    %v234 = vld [vmem:[#allocation7 + $0x1c0] sm:$0xff]
    %v235 = vld [vmem:[#allocation7 + $0x1c8] sm:$0xff]
    %v236 = vld [vmem:[#allocation7 + $0x1d0] sm:$0xff]
    %v237 = vld [vmem:[#allocation7 + $0x1d8] sm:$0xff]
    %v238 = vld [vmem:[#allocation7 + $0x1e0] sm:$0xff]
    %v239 = vld [vmem:[#allocation7 + $0x1e8] sm:$0xff]
    %v240 = vld [vmem:[#allocation7 + $0x1f0] sm:$0xff]
    %v241 = vld [vmem:[#allocation7 + $0x1f8] sm:$0xff]
    %v242 = vld [vmem:[%s4] sm:$0x3]
    %v244 = vlaneseq
    %v245 = vshrl.u32 %v244, 7
    %v246 = vsub.s32 0, %v245
    %v247 = vrot.slane %v242, %v246
    %v248 = vlaneseq
    %v249 = vshrl.u32 %v248, 7
    %v250 = vsub.s32 1, %v249
    %v251 = vrot.slane %v242, %v250
    %254 = vmatprep.subr.mxu0 %v179
    %255 = vmatpush1.msra.mxu0 %v178
    %256 = vmatprep.subr.mxu0 %v181
    %257 = vmatpush1.msra.mxu0 %v180
    %258 = vmatprep.subr.mxu0 %v183
    %259 = vmatpush1.msra.mxu0 %v182
    %260 = vmatprep.subr.mxu0 %v185
    %261 = vmatpush1.msra.mxu0 %v184
    %262 = vmatprep.subr.mxu0 %v187
    %263 = vmatpush1.msra.mxu0 %v186
    %264 = vmatprep.subr.mxu0 %v189
    %265 = vmatpush1.msra.mxu0 %v188
    %266 = vmatprep.subr.mxu0 %v191
    %267 = vmatpush1.msra.mxu0 %v190
    %268 = vmatprep.subr.mxu0 %v193
    %269 = vmatpush1.msra.mxu0 %v192
    %270 = vmatprep.subr.mxu0 %v195
    %271 = vmatpush1.msra.mxu0 %v194
    %272 = vmatprep.subr.mxu0 %v197
    %273 = vmatpush1.msra.mxu0 %v196
    %274 = vmatprep.subr.mxu0 %v199
    %275 = vmatpush1.msra.mxu0 %v198
    %276 = vmatprep.subr.mxu0 %v201
    %277 = vmatpush1.msra.mxu0 %v200
    %278 = vmatprep.subr.mxu0 %v203
    %279 = vmatpush1.msra.mxu0 %v202
    %280 = vmatprep.subr.mxu0 %v205
    %281 = vmatpush1.msra.mxu0 %v204
    %282 = vmatprep.subr.mxu0 %v207
    %283 = vmatpush1.msra.mxu0 %v206
    %284 = vmatprep.subr.mxu0 %v209
    %285 = vmatpush1.msra.mxu0 %v208
    %286 = vmatprep.subr.mxu0 %v211
    %287 = vmatpush1.msra.mxu0 %v210
    %288 = vmatprep.subr.mxu0 %v213
    %289 = vmatpush1.msra.mxu0 %v212
    %290 = vmatprep.subr.mxu0 %v215
    %291 = vmatpush1.msra.mxu0 %v214
    %292 = vmatprep.subr.mxu0 %v217
    %293 = vmatpush1.msra.mxu0 %v216
    %294 = vmatprep.subr.mxu0 %v219
    %295 = vmatpush1.msra.mxu0 %v218
    %296 = vmatprep.subr.mxu0 %v221
    %297 = vmatpush1.msra.mxu0 %v220
    %298 = vmatprep.subr.mxu0 %v223
    %299 = vmatpush1.msra.mxu0 %v222
    %300 = vmatprep.subr.mxu0 %v225
    %301 = vmatpush1.msra.mxu0 %v224
    %302 = vmatprep.subr.mxu0 %v227
    %303 = vmatpush1.msra.mxu0 %v226
    %304 = vmatprep.subr.mxu0 %v229
    %305 = vmatpush1.msra.mxu0 %v228
    %306 = vmatprep.subr.mxu0 %v231
    %307 = vmatpush1.msra.mxu0 %v230
    %308 = vmatprep.subr.mxu0 %v233
    %309 = vmatpush1.msra.mxu0 %v232
    %310 = vmatprep.subr.mxu0 %v235
    %311 = vmatpush1.msra.mxu0 %v234
    %312 = vmatprep.subr.mxu0 %v237
    %313 = vmatpush1.msra.mxu0 %v236
    %314 = vmatprep.subr.mxu0 %v239
    %315 = vmatpush1.msra.mxu0 %v238
    %316 = vmatprep.subr.mxu0 %v241
    %317 = vmatpush1.msra.mxu0 %v240
    %318 = vmatprep.mubr.f32.mxu0 %v177
    %319 = vmatmul.mubr.f32.gmra.mrb[0].mxu0 %v176
    %v320 = vpop.f32.mrb[0].mxu0
    %v321 = vadd.f32 %v247, %v320
    %v322 = vpop.f32.mrb[0].mxu0
    %v323 = vadd.f32 %v251, %v322
    %324 = vdwg.mxu0
    %v327 = vcombine.low %v321, %v323
    %v329 = vunpack.c.l.s4 1966171168
    %v330 = vunpack.c.0.s8 %v329
    %v331 = vlaneseq
    %v332 = vshrl.u32 %v331, 7
    %v333 = vsub.s32 %v330, %v332
    %v334 = vrot.slane %v327, %v333
    %v336 = vunpack.c.l.s4 1966171168
    %v337 = vunpack.c.0.s8 %v336
    %v338 = vlaneseq
    %v339 = vshrl.u32 %v338, 7
    %v340 = vsub.s32 %v337, %v339
    %v341 = vrot.slane %v334, %v340
    %v343 = vlaneseq
    %vm344 = vcmp.ge.s32.totalorder %v343, 0
    %vm345 = vcmp.lt.s32.totalorder %v343, 256
    %vm346 = vmand %vm344, %vm345
    %347 = vst.msk [vmem:[#allocation8] sm:$0x3] %vm346, %v341
    // Predicated region
    $region34: #{tpu_custom_call.1} parent=1 // pred_check
      _
    $region35: #{tpu_custom_call.1} parent=1 // pred_check_branch
      %349 = sbr.rel (0) target = $region37
    $region36: #{tpu_custom_call.1} parent=1 // pred_region
      %s351 = ssub.s32 32, 32
      %352 = vsyncadd [#allocation4], %s351
      %s354 = sshll.u32 [#allocation8], 4
      %s355 = int_to_ptr.vmem [resolvable:$true] %s354
      %357 = dma.vmem_to_hbm [thread:$0]  %s355, 32, %s5, [#allocation4]
    $region37: #{tpu_custom_call.1} parent=1 // pred_fallthru
      _
    // Predicated region
    $region38: #{tpu_custom_call.1} parent=1 // pred_check
      _
    $region39: #{tpu_custom_call.1} parent=1 // pred_check_branch
      %359 = sbr.rel (0) target = $region41
    $region40: #{tpu_custom_call.1} parent=1 // pred_region
      %360 = dma.done [#allocation4], 32
    $region41: #{tpu_custom_call.1} parent=1 // pred_fallthru
      _
    %361 = vsyncpa [#allocation3], 1
    %362 = vsyncpa [#allocation6], 1
    %363 = vsyncpa [#allocation4], 1

</llo_original>
